<compile_context>
chip_gen: v7x
topology: tpu7x:2x2x1
jax: 0.10.0
libtpu: 0.0.40
codegen_flags: <defaults>
</compile_context>

<pallas_src>
import jax
import jax.numpy as jnp
from jax import lax
from jax.experimental import pallas as pl
from jax.experimental.pallas import tpu as pltpu

LANES = 128


def shallownet_kernel(x_ref, w1_ref, b1_ref, w2_ref, b2_ref, o_ref):
    """Batch-in-lanes ShallowNet forward.

    x_ref  : (TR, 128) f32   one batch element per lane
    w1_ref : (Wp, 128) f32   width on sublanes, lane-broadcast copies (resident)
    b1_ref : (Wp, 128) f32
    w2_ref : (Wp, 128) f32
    b2_ref : (1,)      f32   SMEM scalar
    o_ref  : (TR, 128) f32   one result per lane
    """
    tr = x_ref.shape[0]
    b2 = b2_ref[0]

    def row(r, carry):
        xr = x_ref[pl.ds(r, 1), :]                                    # (1, 128)
        # Layer 1: hidden[w, b] = relu(x[b] * w1[w] + b1[w])  -- pure VPU.
        h = jnp.maximum(xr * w1_ref[...] + b1_ref[...], 0.0)          # (Wp, 128)
        # Layer 2: y[b] = sum_w h[w, b] * w2[w] + b2
        #   -> cross-vreg VPU adds over sublane groups + one final sublane reduce.
        y = jnp.sum(h * w2_ref[...], axis=0, keepdims=True) + b2      # (1, 128)
        o_ref[pl.ds(r, 1), :] = y.astype(o_ref.dtype)
        return carry

    lax.fori_loop(0, tr, row, 0, unroll=(tr if tr <= 8 else 8))


def shallownet_forward(x, w1, b1, w2, b2):
    """x: (B, 1); w1: (1, width); b1: (1, width); w2: (width, 1); b2: (1, 1) -> (B, 1)."""
    B, input_dim = x.shape
    width = w1.shape[1]
    out_dim = w2.shape[1]
    assert input_dim == 1 and out_dim == 1, "kernel is specialized to ShallowNet defaults"

    # ---- width on sublanes (padded to a multiple of 8), lane-broadcast weight copies ----
    wpad = (-width) % 8
    Wp = width + wpad
    w1c = jnp.pad(w1.reshape(width, 1), ((0, wpad), (0, 0)))   # zero pad -> identical math
    b1c = jnp.pad(b1.reshape(width, 1), ((0, wpad), (0, 0)))
    w2c = jnp.pad(w2.reshape(width, 1), ((0, wpad), (0, 0)))
    w1b = jnp.broadcast_to(w1c, (Wp, LANES))
    b1b = jnp.broadcast_to(b1c, (Wp, LANES))
    w2b = jnp.broadcast_to(w2c, (Wp, LANES))
    b2s = b2.reshape((1,))                                      # SMEM scalar

    # ---- batch on lanes: x -> (R_pad, 128), one element per lane ----
    R = -(-B // LANES)                       # lane-rows needed
    if R <= 8:
        TR = R                               # single step; block == full dim (no 8-row rule)
    else:
        # >=2 grid steps (v7x TC sharding), 8..64 rows (1K..8K elements) per step.
        TR = min(64, max(8, 8 * (R // 16)))
    R_pad = -(-R // TR) * TR
    Bp = R_pad * LANES
    x_lanes = jnp.pad(x.reshape(-1), (0, Bp - B)).reshape(R_pad, LANES)

    grid = (R_pad // TR,)

    flops = 4 * B * width + B
    bytes_accessed = 4 * (2 * R_pad * LANES + 3 * Wp * LANES + 1)   # x + out + weights + b2

    y_lanes = pl.pallas_call(
        shallownet_kernel,
        out_shape=jax.ShapeDtypeStruct((R_pad, LANES), x.dtype),
        grid_spec=pltpu.PrefetchScalarGridSpec(
            num_scalar_prefetch=0,
            grid=grid,
            in_specs=[
                pl.BlockSpec((TR, LANES), lambda i: (i, 0)),            # x (streamed)
                pl.BlockSpec((Wp, LANES), lambda i: (0, 0)),            # w1 (VMEM-resident)
                pl.BlockSpec((Wp, LANES), lambda i: (0, 0)),            # b1 (VMEM-resident)
                pl.BlockSpec((Wp, LANES), lambda i: (0, 0)),            # w2 (VMEM-resident)
                pl.BlockSpec(memory_space=pltpu.MemorySpace.SMEM),      # b2 scalar
            ],
            out_specs=pl.BlockSpec((TR, LANES), lambda i: (i, 0)),
        ),
        compiler_params=pltpu.CompilerParams(
            dimension_semantics=("parallel",),   # batch axis shards over v7x's 2 TCs
        ),
        cost_estimate=pl.CostEstimate(
            flops=flops, transcendentals=0, bytes_accessed=bytes_accessed),
    )(x_lanes, w1b, b1b, w2b, b2s)

    # Contiguous reshape + tiny [:B] slice (no re-read of a padded 128-wide slab).
    return y_lanes.reshape(-1)[:B].reshape(B, out_dim)


def init_params(key, input_dim=1, width=100, output_dim=1, dtype=jnp.float32):
    """Deterministic init mimicking torch nn.Linear (U(-1/sqrt(fan_in), 1/sqrt(fan_in)))."""
    k1, k2, k3, k4 = jax.random.split(key, 4)
    bound1 = 1.0 / (input_dim ** 0.5)
    bound2 = 1.0 / (width ** 0.5)
    w1 = jax.random.uniform(k1, (input_dim, width), dtype, -bound1, bound1)
    b1 = jax.random.uniform(k2, (1, width), dtype, -bound1, bound1)
    w2 = jax.random.uniform(k3, (width, output_dim), dtype, -bound2, bound2)
    b2 = jax.random.uniform(k4, (1, output_dim), dtype, -bound2, bound2)
    return w1, b1, w2, b2


if __name__ == "__main__":
    key = jax.random.PRNGKey(0)
    k_x, k_p, k_x2 = jax.random.split(key, 3)

    batch, input_dim, width, output_dim = 8, 1, 100, 1
    w1, b1, w2, b2 = init_params(k_p, input_dim, width, output_dim)

    # Small-shape check (single grid step, TR == 1).
    x = jax.random.normal(k_x, (batch, input_dim), dtype=jnp.float32)
    y = jax.block_until_ready(shallownet_forward(x, w1, b1, w2, b2))
    y_ref = jnp.maximum(x @ w1 + b1, 0.0) @ w2 + b2
    assert y.shape == (batch, output_dim)
    assert jnp.allclose(y, y_ref, atol=1e-5, rtol=1e-5)

    # Multi-step check (exercises grid > 1, TR = 8 inner loop, batch padding).
    x2 = jax.random.normal(k_x2, (2500, input_dim), dtype=jnp.float32)
    y2 = jax.block_until_ready(shallownet_forward(x2, w1, b1, w2, b2))
    y2_ref = jnp.maximum(x2 @ w1 + b1, 0.0) @ w2 + b2
    assert y2.shape == (2500, output_dim)
    assert jnp.allclose(y2, y2_ref, atol=1e-5, rtol=1e-5)

    print("KERNEL_OK")
</pallas_src>

<mosaic_0001>
module attributes {stable_mosaic.version = 11 : i64} {
  func.func @shallownet_kernel(%arg0: i32, %arg1: memref<1x128xf32, #tpu.memory_space<vmem>>, %arg2: memref<104x128xf32, #tpu.memory_space<vmem>>, %arg3: memref<104x128xf32, #tpu.memory_space<vmem>>, %arg4: memref<104x128xf32, #tpu.memory_space<vmem>>, %arg5: memref<1xf32, #tpu.memory_space<smem>>, %arg6: memref<1x128xf32, #tpu.memory_space<vmem>>) attributes {dimension_semantics = [#tpu.dimension_semantics<parallel>], iteration_bounds = array<i64: 1>, scalar_prefetch = 0 : i64, scratch_operands = 0 : i64, tpu.core_type = #tpu.core_type<tc>, window_params = [{transform_indices = @transform_0, window_bounds = array<i64: 1, 128>}, {pipeline_mode = #tpu.pipeline_mode<synchronous>, transform_indices = @transform_1, window_bounds = array<i64: 104, 128>}, {pipeline_mode = #tpu.pipeline_mode<synchronous>, transform_indices = @transform_2, window_bounds = array<i64: 104, 128>}, {pipeline_mode = #tpu.pipeline_mode<synchronous>, transform_indices = @transform_3, window_bounds = array<i64: 104, 128>}, {transform_indices = @transform_4, window_bounds = array<i64: 1>}, {transform_indices = @transform_5, window_bounds = array<i64: 1, 128>}]} {
    %c0 = arith.constant 0 : index
    %0 = memref.load %arg5[%c0] : memref<1xf32, #tpu.memory_space<smem>>
    %c0_i32 = arith.constant 0 : i32
    %1 = arith.index_cast %c0_i32 : i32 to index
    %c0_0 = arith.constant 0 : index
    %2 = vector.load %arg1[%1, %c0_0] : memref<1x128xf32, #tpu.memory_space<vmem>>, vector<1x128xf32>
    %c0_1 = arith.constant 0 : index
    %c0_2 = arith.constant 0 : index
    %3 = vector.load %arg2[%c0_1, %c0_2] : memref<104x128xf32, #tpu.memory_space<vmem>>, vector<104x128xf32>
    %4 = vector.broadcast %2 : vector<1x128xf32> to vector<104x128xf32>
    %5 = arith.mulf %4, %3 : vector<104x128xf32>
    %c0_3 = arith.constant 0 : index
    %c0_4 = arith.constant 0 : index
    %6 = vector.load %arg3[%c0_3, %c0_4] : memref<104x128xf32, #tpu.memory_space<vmem>>, vector<104x128xf32>
    %7 = arith.addf %5, %6 : vector<104x128xf32>
    %cst = arith.constant 0.000000e+00 : f32
    %8 = vector.broadcast %cst : f32 to vector<104x128xf32>
    %9 = arith.maximumf %7, %8 : vector<104x128xf32>
    %c0_5 = arith.constant 0 : index
    %c0_6 = arith.constant 0 : index
    %10 = vector.load %arg4[%c0_5, %c0_6] : memref<104x128xf32, #tpu.memory_space<vmem>>, vector<104x128xf32>
    %11 = arith.mulf %9, %10 : vector<104x128xf32>
    %cst_7 = arith.constant dense<0.000000e+00> : vector<128xf32>
    %12 = vector.multi_reduction <add>, %11, %cst_7 [0] : vector<104x128xf32> to vector<128xf32>
    %13 = vector.shape_cast %12 : vector<128xf32> to vector<1x128xf32>
    %14 = vector.broadcast %0 : f32 to vector<1x128xf32>
    %15 = arith.addf %13, %14 : vector<1x128xf32>
    %16 = arith.index_cast %c0_i32 : i32 to index
    %c0_8 = arith.constant 0 : index
    %17 = vector.load %arg6[%16, %c0_8] : memref<1x128xf32, #tpu.memory_space<vmem>>, vector<1x128xf32>
    tpu.vector_store %arg6[%16, %c0_8], %15 {strides = array<i32>} : memref<1x128xf32, #tpu.memory_space<vmem>>, vector<1x128xf32>,
    %c1_i32 = arith.constant 1 : i32
    return
  }
  func.func @transform_0(%arg0: i32) -> (i32, i32) {
    %c0_i32 = arith.constant 0 : i32
    %c0_i32_0 = arith.constant 0 : i32
    return %arg0, %c0_i32 : i32, i32
  }
  func.func @transform_1(%arg0: i32) -> (i32, i32) {
    %c0_i32 = arith.constant 0 : i32
    %c0_i32_0 = arith.constant 0 : i32
    %c0_i32_1 = arith.constant 0 : i32
    return %c0_i32, %c0_i32_0 : i32, i32
  }
  func.func @transform_2(%arg0: i32) -> (i32, i32) {
    %c0_i32 = arith.constant 0 : i32
    %c0_i32_0 = arith.constant 0 : i32
    %c0_i32_1 = arith.constant 0 : i32
    return %c0_i32, %c0_i32_0 : i32, i32
  }
  func.func @transform_3(%arg0: i32) -> (i32, i32) {
    %c0_i32 = arith.constant 0 : i32
    %c0_i32_0 = arith.constant 0 : i32
    %c0_i32_1 = arith.constant 0 : i32
    return %c0_i32, %c0_i32_0 : i32, i32
  }
  func.func @transform_4(%arg0: i32) -> i32 {
    %c0_i32 = arith.constant 0 : i32
    %c0_i32_0 = arith.constant 0 : i32
    return %c0_i32 : i32
  }
  func.func @transform_5(%arg0: i32) -> (i32, i32) {
    %c0_i32 = arith.constant 0 : i32
    %c0_i32_0 = arith.constant 0 : i32
    return %arg0, %c0_i32 : i32, i32
  }
}

</mosaic_0001>

<llo_original>
// kernel: tpu_custom_call.1
$region0: #{tpu_custom_call.1}
  #allocation0 [shape = 'u32[]', space=smem, size = 0x4, offset = 0x4, fixed_abs, tag = 'smem constant byte address 0x4 - core index']
  #allocation1 [shape = 'u32[144,128]{1,0:T(1,128)}', space=vmem, size = 0x12000, scoped, tag = 'internal scratch']
  #allocation2 [shape = 'f32[1]{0:T(128)S(6)}', space=smem, size = 0x200, scoped, tag = 'scoped memory for tpu_custom_call.1']
  %s0 = inlined_call_operand.vmem [shape: f32[1,128], index: 0, kind: input, shape index: {}]
  %s1 = inlined_call_operand.hbm [shape: f32[104,128], index: 1, kind: input, shape index: {}]
  %s2 = inlined_call_operand.hbm [shape: f32[104,128], index: 2, kind: input, shape index: {}]
  %s3 = inlined_call_operand.hbm [shape: f32[104,128], index: 3, kind: input, shape index: {}]
  %s4 = inlined_call_operand.<no memory space> [shape: f32[1], index: 4, kind: input, shape index: {}]
  %s5 = inlined_call_operand.hbm [shape: f32[1,128], index: 5, kind: output, shape index: {}]
  %s6 = sld [smem:[#allocation0]]
  $region42: #{tpu_custom_call.1} parent=0
    _
  %s8 = ssub.s32 1, %s6
  %s9 = scalar_select 0, %s8, %s6
  %10 = sst [smem:[#allocation2]] %s4
  $region1: #{tpu_custom_call.1} parent=0
    #allocation3 [shape = 'u8[53248]{0}', space=vmem, size = 0xd000, scoped, tag = 'input window, operand 1, single buffered']
    #allocation4 [shape = 's32[1]{0}', space=sflag, size = 0x4, scoped, tag = 'scoped memory for tpu_custom_call.1']
    #allocation5 [shape = 's32[1]{0}', space=sflag, size = 0x4, scoped, tag = 'scoped memory for tpu_custom_call.1']
    #allocation6 [shape = 'u8[53248]{0}', space=vmem, size = 0xd000, scoped, tag = 'input window, operand 2, single buffered']
    #allocation7 [shape = 's32[1]{0}', space=sflag, size = 0x4, scoped, tag = 'scoped memory for tpu_custom_call.1']
    #allocation8 [shape = 'u8[53248]{0}', space=vmem, size = 0xd000, scoped, tag = 'input window, operand 3, single buffered']
    #allocation9 [shape = 'u8[512]{0}', space=vmem, size = 0x400, scoped, tag = 'output window, operand 0, single buffered']
    %11 = vsyncpa [#allocation4], 0
    %12 = vsyncpa [#allocation7], 0
    %13 = vsyncpa [#allocation5], 0
    // Predicated region
    $region2: #{tpu_custom_call.1} parent=1 // pred_check
      _
    $region3: #{tpu_custom_call.1} parent=1 // pred_check_branch
      %15 = sbr.rel (0) target = $region5
    $region4: #{tpu_custom_call.1} parent=1 // pred_region
      _
    $region5: #{tpu_custom_call.1} parent=1 // pred_fallthru
      _
    // Predicated region
    $region6: #{tpu_custom_call.1} parent=1 // pred_check
      _
    $region7: #{tpu_custom_call.1} parent=1 // pred_check_branch
      %17 = sbr.rel (0) target = $region9
    $region8: #{tpu_custom_call.1} parent=1 // pred_region
      %s19 = ssub.s32 1664, 1664
      %20 = vsyncadd [#allocation4], %s19
      %s21 = sshll.u32 [#allocation3], 4
      %s22 = int_to_ptr.vmem [resolvable:$true] %s21
      %27 = dma.hbm_to_vmem [thread:$0]  %s1, 1664, %s22, [#allocation4], 128, 128, 8
    $region9: #{tpu_custom_call.1} parent=1 // pred_fallthru
      _
    // Predicated region
    $region10: #{tpu_custom_call.1} parent=1 // pred_check
      _
    $region11: #{tpu_custom_call.1} parent=1 // pred_check_branch
      %29 = sbr.rel (0) target = $region13
    $region12: #{tpu_custom_call.1} parent=1 // pred_region
      %s31 = ssub.s32 1664, 1664
      %32 = vsyncadd [#allocation7], %s31
      %s33 = sshll.u32 [#allocation6], 4
      %s34 = int_to_ptr.vmem [resolvable:$true] %s33
      %39 = dma.hbm_to_vmem [thread:$0]  %s2, 1664, %s34, [#allocation7], 128, 128, 8
    $region13: #{tpu_custom_call.1} parent=1 // pred_fallthru
      _
    // Predicated region
    $region14: #{tpu_custom_call.1} parent=1 // pred_check
      _
    $region15: #{tpu_custom_call.1} parent=1 // pred_check_branch
      %41 = sbr.rel (0) target = $region17
    $region16: #{tpu_custom_call.1} parent=1 // pred_region
      %s43 = ssub.s32 1664, 1664
      %44 = vsyncadd [#allocation7], %s43
      %s45 = sshll.u32 [#allocation8], 4
      %s46 = int_to_ptr.vmem [resolvable:$true] %s45
      %51 = dma.hbm_to_vmem [thread:$0]  %s3, 1664, %s46, [#allocation7], 128, 128, 8
    $region17: #{tpu_custom_call.1} parent=1 // pred_fallthru
      _
    // Predicated region
    $region18: #{tpu_custom_call.1} parent=1 // pred_check
      _
    $region19: #{tpu_custom_call.1} parent=1 // pred_check_branch
      %53 = sbr.rel (0) target = $region21
    $region20: #{tpu_custom_call.1} parent=1 // pred_region
      _
    $region21: #{tpu_custom_call.1} parent=1 // pred_fallthru
      _
    // Predicated region
    $region22: #{tpu_custom_call.1} parent=1 // pred_check
      _
    $region23: #{tpu_custom_call.1} parent=1 // pred_check_branch
      %55 = sbr.rel (0) target = $region25
    $region24: #{tpu_custom_call.1} parent=1 // pred_region
      %56 = dma.done [#allocation4], 1664
    $region25: #{tpu_custom_call.1} parent=1 // pred_fallthru
      _
    // Predicated region
    $region26: #{tpu_custom_call.1} parent=1 // pred_check
      _
    $region27: #{tpu_custom_call.1} parent=1 // pred_check_branch
      %58 = sbr.rel (0) target = $region29
    $region28: #{tpu_custom_call.1} parent=1 // pred_region
      %59 = dma.done [#allocation7], 1664
    $region29: #{tpu_custom_call.1} parent=1 // pred_fallthru
      _
    // Predicated region
    $region30: #{tpu_custom_call.1} parent=1 // pred_check
      _
    $region31: #{tpu_custom_call.1} parent=1 // pred_check_branch
      %61 = sbr.rel (0) target = $region33
    $region32: #{tpu_custom_call.1} parent=1 // pred_region
      %62 = dma.done [#allocation7], 1664
    $region33: #{tpu_custom_call.1} parent=1 // pred_fallthru
      _
    %s63 = sld [smem:[#allocation2]]
    %v64 = vld [vmem:[%s0] sm:$0x1]
    %v65 = vld [vmem:[#allocation3] sm:$0xff]
    %v66 = vld [vmem:[#allocation3 + $0x8] sm:$0xff]
    %v67 = vld [vmem:[#allocation3 + $0x10] sm:$0xff]
    %v68 = vld [vmem:[#allocation3 + $0x18] sm:$0xff]
    %v69 = vld [vmem:[#allocation3 + $0x20] sm:$0xff]
    %v70 = vld [vmem:[#allocation3 + $0x28] sm:$0xff]
    %v71 = vld [vmem:[#allocation3 + $0x30] sm:$0xff]
    %v72 = vld [vmem:[#allocation3 + $0x38] sm:$0xff]
    %v73 = vld [vmem:[#allocation3 + $0x40] sm:$0xff]
    %v74 = vld [vmem:[#allocation3 + $0x48] sm:$0xff]
    %v75 = vld [vmem:[#allocation3 + $0x50] sm:$0xff]
    %v76 = vld [vmem:[#allocation3 + $0x58] sm:$0xff]
    %v77 = vld [vmem:[#allocation3 + $0x60] sm:$0xff]
    %v79 = vlaneseq
    %v80 = vshrl.u32 %v79, 7
    %v81 = vsub.s32 0, %v80
    %v82 = vrot.slane %v64, %v81
    %v84 = vmul.f32 %v82, %v65
    %v85 = vmul.f32 %v82, %v66
    %v86 = vmul.f32 %v82, %v67
    %v87 = vmul.f32 %v82, %v68
    %v88 = vmul.f32 %v82, %v69
    %v89 = vmul.f32 %v82, %v70
    %v90 = vmul.f32 %v82, %v71
    %v91 = vmul.f32 %v82, %v72
    %v92 = vmul.f32 %v82, %v73
    %v93 = vmul.f32 %v82, %v74
    %v94 = vmul.f32 %v82, %v75
    %v95 = vmul.f32 %v82, %v76
    %v96 = vmul.f32 %v82, %v77
    %v97 = vld [vmem:[#allocation6] sm:$0xff]
    %v98 = vld [vmem:[#allocation6 + $0x8] sm:$0xff]
    %v99 = vld [vmem:[#allocation6 + $0x10] sm:$0xff]
    %v100 = vld [vmem:[#allocation6 + $0x18] sm:$0xff]
    %v101 = vld [vmem:[#allocation6 + $0x20] sm:$0xff]
    %v102 = vld [vmem:[#allocation6 + $0x28] sm:$0xff]
    %v103 = vld [vmem:[#allocation6 + $0x30] sm:$0xff]
    %v104 = vld [vmem:[#allocation6 + $0x38] sm:$0xff]
    %v105 = vld [vmem:[#allocation6 + $0x40] sm:$0xff]
    %v106 = vld [vmem:[#allocation6 + $0x48] sm:$0xff]
    %v107 = vld [vmem:[#allocation6 + $0x50] sm:$0xff]
    %v108 = vld [vmem:[#allocation6 + $0x58] sm:$0xff]
    %v109 = vld [vmem:[#allocation6 + $0x60] sm:$0xff]
    %v110 = vadd.f32 %v84, %v97
    %v111 = vadd.f32 %v85, %v98
    %v112 = vadd.f32 %v86, %v99
    %v113 = vadd.f32 %v87, %v100
    %v114 = vadd.f32 %v88, %v101
    %v115 = vadd.f32 %v89, %v102
    %v116 = vadd.f32 %v90, %v103
    %v117 = vadd.f32 %v91, %v104
    %v118 = vadd.f32 %v92, %v105
    %v119 = vadd.f32 %v93, %v106
    %v120 = vadd.f32 %v94, %v107
    %v121 = vadd.f32 %v95, %v108
    %v122 = vadd.f32 %v96, %v109
    %v123 = vmax.f32 %v110, 0.0
    %v124 = vmax.f32 %v111, 0.0
    %v125 = vmax.f32 %v112, 0.0
    %v126 = vmax.f32 %v113, 0.0
    %v127 = vmax.f32 %v114, 0.0
    %v128 = vmax.f32 %v115, 0.0
    %v129 = vmax.f32 %v116, 0.0
    %v130 = vmax.f32 %v117, 0.0
    %v131 = vmax.f32 %v118, 0.0
    %v132 = vmax.f32 %v119, 0.0
    %v133 = vmax.f32 %v120, 0.0
    %v134 = vmax.f32 %v121, 0.0
    %v135 = vmax.f32 %v122, 0.0
    %v136 = vld [vmem:[#allocation8] sm:$0xff]
    %v137 = vld [vmem:[#allocation8 + $0x8] sm:$0xff]
    %v138 = vld [vmem:[#allocation8 + $0x10] sm:$0xff]
    %v139 = vld [vmem:[#allocation8 + $0x18] sm:$0xff]
    %v140 = vld [vmem:[#allocation8 + $0x20] sm:$0xff]
    %v141 = vld [vmem:[#allocation8 + $0x28] sm:$0xff]
    %v142 = vld [vmem:[#allocation8 + $0x30] sm:$0xff]
    %v143 = vld [vmem:[#allocation8 + $0x38] sm:$0xff]
    %v144 = vld [vmem:[#allocation8 + $0x40] sm:$0xff]
    %v145 = vld [vmem:[#allocation8 + $0x48] sm:$0xff]
    %v146 = vld [vmem:[#allocation8 + $0x50] sm:$0xff]
    %v147 = vld [vmem:[#allocation8 + $0x58] sm:$0xff]
    %v148 = vld [vmem:[#allocation8 + $0x60] sm:$0xff]
    %v149 = vmul.f32 %v123, %v136
    %v150 = vmul.f32 %v124, %v137
    %v151 = vmul.f32 %v125, %v138
    %v152 = vmul.f32 %v126, %v139
    %v153 = vmul.f32 %v127, %v140
    %v154 = vmul.f32 %v128, %v141
    %v155 = vmul.f32 %v129, %v142
    %v156 = vmul.f32 %v130, %v143
    %v157 = vmul.f32 %v131, %v144
    %v158 = vmul.f32 %v132, %v145
    %v159 = vmul.f32 %v133, %v146
    %v160 = vmul.f32 %v134, %v147
    %v161 = vmul.f32 %v135, %v148
    %v162 = vadd.f32 %v149, %v150
    %v163 = vadd.f32 %v162, %v151
    %v164 = vadd.f32 %v163, %v152
    %v165 = vadd.f32 %v164, %v153
    %v166 = vadd.f32 %v165, %v154
    %v167 = vadd.f32 %v166, %v155
    %v168 = vadd.f32 %v167, %v156
    %v169 = vadd.f32 %v168, %v157
    %v170 = vadd.f32 %v169, %v158
    %v171 = vadd.f32 %v170, %v159
    %v172 = vadd.f32 %v171, %v160
    %v173 = vadd.f32 %v172, %v161
    %v174 = vrot.slane %v173, 4
    %v175 = vadd.f32 %v173, %v174
    %v176 = vrot.slane %v175, 2
    %v177 = vadd.f32 %v175, %v176
    %v178 = vrot.slane %v177, 1
    %v179 = vadd.f32 %v177, %v178
    %v180 = vstv %s63
    %v181 = vadd.f32 %v179, %v180
    %182 = vst [vmem:[#allocation9] sm:$0x1] %v181
    // Predicated region
    $region34: #{tpu_custom_call.1} parent=1 // pred_check
      _
    $region35: #{tpu_custom_call.1} parent=1 // pred_check_branch
      %184 = sbr.rel (0) target = $region37
    $region36: #{tpu_custom_call.1} parent=1 // pred_region
      %s186 = ssub.s32 16, 16
      %187 = vsyncadd [#allocation5], %s186
      %s189 = sshll.u32 [#allocation9], 4
      %s190 = int_to_ptr.vmem [resolvable:$true] %s189
      %192 = dma.vmem_to_hbm [thread:$0]  %s190, 16, %s5, [#allocation5]
    $region37: #{tpu_custom_call.1} parent=1 // pred_fallthru
      _
    // Predicated region
    $region38: #{tpu_custom_call.1} parent=1 // pred_check
      _
    $region39: #{tpu_custom_call.1} parent=1 // pred_check_branch
      %194 = sbr.rel (0) target = $region41
    $region40: #{tpu_custom_call.1} parent=1 // pred_region
      %195 = dma.done [#allocation5], 16
    $region41: #{tpu_custom_call.1} parent=1 // pred_fallthru
      _
    %196 = vsyncpa [#allocation4], 1
    %197 = vsyncpa [#allocation7], 1
    %198 = vsyncpa [#allocation5], 1

</llo_original>
